<compile_context>
chip_gen: v5e
topology: v5e:2x2
jax: 0.10.0
libtpu: 0.0.40
codegen_flags: <defaults>
</compile_context>

<pallas_src>
import functools

import jax
import jax.numpy as jnp
from jax.experimental import pallas as pl
from jax.experimental.pallas import tpu as pltpu


def _wrapper_forward_kernel(x_ref, w_ref, b_ref, lab_ref,
                            logits_ref, nll_ref, acc_ref,
                            *, num_classes, seq_len):
    # x_ref:      [TB, TS, H] input tile
    # w_ref:      [H, Cpad]   classifier weight (resident, lane-dense)
    # b_ref:      [1, Cpad]   classifier bias   (resident, lane-dense)
    # lab_ref:    [TB, 1]     int32 labels
    # logits_ref: [TB, Cpad]  output (padded columns are zero)
    # nll_ref:    [TB, 1]     output per-row negative log-likelihood
    # acc_ref:    [TB, H]     f32 VMEM scratch: running sum over S
    k = pl.program_id(1)

    @pl.when(k == 0)
    def _init():
        acc_ref[...] = jnp.zeros_like(acc_ref)

    # f32 running sum over the sequence tile (f32 accumulation keeps v5e happy
    # even if x later becomes bf16; the 1/S mean is folded into the epilogue).
    acc_ref[...] += jnp.sum(x_ref[...].astype(jnp.float32), axis=1)

    @pl.when(k == pl.num_programs(1) - 1)
    def _finalize():
        pooled_sum = acc_ref[...]                                    # [TB, H]
        logits = jnp.dot(pooled_sum, w_ref[...],
                         preferred_element_type=jnp.float32)         # MXU
        logits = logits * jnp.float32(1.0 / seq_len) + b_ref[...]    # [TB, Cpad]
        logits_ref[...] = logits.astype(logits_ref.dtype)

        # Numerically-stable softmax cross-entropy over the first `num_classes`
        # columns only (padded columns are masked out).
        col = jax.lax.broadcasted_iota(jnp.int32, logits.shape, 1)
        valid = col < num_classes
        z = jnp.where(valid, logits, jnp.float32(-1e30))
        m = jnp.max(z, axis=-1, keepdims=True)
        e = jnp.where(valid, jnp.exp(z - m), jnp.float32(0.0))
        lse = jnp.log(jnp.sum(e, axis=-1, keepdims=True)) + m        # [TB, 1]
        hit = col == lab_ref[...]                                    # one-hot mask, no HBM array
        nll_ref[...] = jnp.sum(jnp.where(hit, lse - z, jnp.float32(0.0)),
                               axis=-1, keepdims=True)               # [TB, 1]


def _pick_tile(dim, target):
    """Largest multiple of 8 that divides `dim` and is <= target, else full dim."""
    if dim % 8 != 0:
        return dim                       # full extent satisfies the (8,128) rule
    best = 8
    t = 8
    while t <= min(dim, target):
        if dim % t == 0:
            best = t
        t += 8
    return best


def model_wrapper_forward(input_dict, params):
    """Equivalent of Model_Wrapper_Base.forward: returns (logits, loss)."""
    x = input_dict["inputs_embeds"]           # [B, S, H]
    labels = input_dict["labels"]             # [B] int
    W = params["classifier_w"]                # [H, C]
    b = params["classifier_b"]                # [C]
    B, S, H = x.shape
    C = W.shape[1]
    c_pad = ((C + 127) // 128) * 128          # lane-dense output width

    # Lane-dense classifier head (tiny, parameter-sized padding done once).
    w_pad = jnp.zeros((H, c_pad), jnp.float32).at[:, :C].set(W.astype(jnp.float32))
    b_pad = jnp.zeros((1, c_pad), jnp.float32).at[0, :C].set(b.astype(jnp.float32))
    lab2d = labels.astype(jnp.int32).reshape(B, 1)

    # Tile sizes: TB over batch (parallel -> megacore on v7x), TS over sequence
    # (arbitrary reduction axis, accumulated in VMEM scratch).  Keep the
    # double-buffered x tile well under the v7x 32 MiB default-scoped VMEM.
    tb = _pick_tile(B, 128)
    ts_target = max(8, (8 * 1024 * 1024) // max(1, 2 * tb * H * 4))
    ts = _pick_tile(S, ts_target)
    grid = (B // tb, S // ts)

    kernel = functools.partial(_wrapper_forward_kernel,
                               num_classes=C, seq_len=S)

    itemsize = jnp.dtype(x.dtype).itemsize
    cost = pl.CostEstimate(
        flops=2 * B * H * c_pad + B * S * H,
        transcendentals=B * c_pad + B,
        bytes_accessed=(B * S * H * itemsize + H * c_pad * 4 + c_pad * 4
                        + B * 4 + B * c_pad * 4 + B * 4),
    )

    logits_pad, nll = pl.pallas_call(
        kernel,
        out_shape=(
            jax.ShapeDtypeStruct((B, c_pad), jnp.float32),
            jax.ShapeDtypeStruct((B, 1), jnp.float32),
        ),
        grid_spec=pltpu.PrefetchScalarGridSpec(
            num_scalar_prefetch=0,
            grid=grid,
            in_specs=[
                pl.BlockSpec((tb, ts, H), lambda i, k: (i, k, 0)),   # x tile
                pl.BlockSpec((H, c_pad), lambda i, k: (0, 0)),       # W (resident)
                pl.BlockSpec((1, c_pad), lambda i, k: (0, 0)),       # b (resident)
                pl.BlockSpec((tb, 1), lambda i, k: (i, 0)),          # labels
            ],
            out_specs=(
                pl.BlockSpec((tb, c_pad), lambda i, k: (i, 0)),      # logits (lane-dense)
                pl.BlockSpec((tb, 1), lambda i, k: (i, 0)),          # per-row NLL
            ),
            scratch_shapes=[pltpu.VMEM((tb, H), jnp.float32)],
        ),
        compiler_params=pltpu.CompilerParams(
            dimension_semantics=("parallel", "arbitrary")),
        cost_estimate=cost,
    )(x, w_pad, b_pad, lab2d)

    logits = logits_pad[:, :C]
    loss = jnp.mean(nll[:, 0])
    # TODO(synk): HF-style ignore_index=-100 semantics not handled; all labels
    # are assumed valid class indices (matches the synthetic reference model).
    return logits, loss


def _reference_forward(input_dict, params):
    """Pure-JAX reference for correctness checking."""
    x = input_dict["inputs_embeds"]
    labels = input_dict["labels"]
    W, b = params["classifier_w"], params["classifier_b"]
    pooled = jnp.mean(x, axis=1)
    logits = pooled @ W + b
    logp = jax.nn.log_softmax(logits, axis=-1)
    nll = -jnp.take_along_axis(logp, labels[:, None], axis=-1)[:, 0]
    return logits, jnp.mean(nll)


if __name__ == "__main__":
    # Small shapes consistent with the wrapper's forward: batch=16, seq=32,
    # hidden=32, classes=4 (big enough to exercise the (2, 4) grid).
    B, S, H, C = 16, 32, 32, 4

    key = jax.random.PRNGKey(0)
    kx, kw, kb, kl = jax.random.split(key, 4)

    x = jax.random.normal(kx, (B, S, H), dtype=jnp.float32)
    labels = jax.random.randint(kl, (B,), 0, C, dtype=jnp.int32)

    # Deterministic in-script parameter init (synthetic classifier head).
    params = {
        "classifier_w": jax.random.normal(kw, (H, C), dtype=jnp.float32) * 0.02,
        "classifier_b": jax.random.normal(kb, (C,), dtype=jnp.float32) * 0.02,
    }

    input_dict = {"inputs_embeds": x, "labels": labels}

    logits, loss = model_wrapper_forward(input_dict, params)
    jax.block_until_ready((logits, loss))

    ref_logits, ref_loss = _reference_forward(input_dict, params)
    assert jnp.allclose(logits, ref_logits, atol=1e-4, rtol=1e-4), "logits mismatch"
    assert jnp.allclose(loss, ref_loss, atol=1e-4, rtol=1e-4), "loss mismatch"

    # TODO(synk): regularization_loss / trainable_param iterators are PyTorch
    # parameter-bookkeeping with no kernel equivalent; only forward is ported.
    print("KERNEL_OK")
</pallas_src>

<mosaic_0001>
module attributes {stable_mosaic.version = 11 : i64} {
  func.func @_wrapper_forward_kernel(%arg0: i32, %arg1: i32, %arg2: memref<16x32x32xf32, #tpu.memory_space<vmem>>, %arg3: memref<32x128xf32, #tpu.memory_space<vmem>>, %arg4: memref<1x128xf32, #tpu.memory_space<vmem>>, %arg5: memref<16x1xi32, #tpu.memory_space<vmem>>, %arg6: memref<16x128xf32, #tpu.memory_space<vmem>>, %arg7: memref<16x1xf32, #tpu.memory_space<vmem>>, %arg8: memref<16x32xf32, #tpu.memory_space<vmem>>) attributes {dimension_semantics = [#tpu.dimension_semantics<parallel>, #tpu.dimension_semantics<arbitrary>], iteration_bounds = array<i64: 1, 1>, scalar_prefetch = 0 : i64, scratch_operands = 1 : i64, tpu.core_type = #tpu.core_type<tc>, window_params = [{transform_indices = @transform_0, window_bounds = array<i64: 16, 32, 32>}, {pipeline_mode = #tpu.pipeline_mode<synchronous>, transform_indices = @transform_1, window_bounds = array<i64: 32, 128>}, {pipeline_mode = #tpu.pipeline_mode<synchronous>, transform_indices = @transform_2, window_bounds = array<i64: 1, 128>}, {transform_indices = @transform_3, window_bounds = array<i64: 16, 1>}, {transform_indices = @transform_4, window_bounds = array<i64: 16, 128>}, {transform_indices = @transform_5, window_bounds = array<i64: 16, 1>}]} {
    %c0_i32 = arith.constant 0 : i32
    %0 = arith.cmpi eq, %arg1, %c0_i32 : i32
    %1 = arith.extui %0 : i1 to i32
    %c0_i32_0 = arith.constant 0 : i32
    %2 = arith.cmpi ne, %1, %c0_i32_0 : i32
    scf.if %2 {
      %cst_9 = arith.constant 0.000000e+00 : f32
      %11 = vector.broadcast %cst_9 : f32 to vector<16x32xf32>
      %c0_10 = arith.constant 0 : index
      %c0_11 = arith.constant 0 : index
      %12 = vector.load %arg8[%c0_10, %c0_11] : memref<16x32xf32, #tpu.memory_space<vmem>>, vector<16x32xf32>
      tpu.vector_store %arg8[%c0_10, %c0_11], %11 {strides = array<i32>} : memref<16x32xf32, #tpu.memory_space<vmem>>, vector<16x32xf32>,
    } else {
    }
    %c0 = arith.constant 0 : index
    %c0_1 = arith.constant 0 : index
    %3 = vector.load %arg8[%c0, %c0_1] : memref<16x32xf32, #tpu.memory_space<vmem>>, vector<16x32xf32>
    %c0_2 = arith.constant 0 : index
    %c0_3 = arith.constant 0 : index
    %c0_4 = arith.constant 0 : index
    %4 = vector.load %arg2[%c0_2, %c0_3, %c0_4] : memref<16x32x32xf32, #tpu.memory_space<vmem>>, vector<16x32x32xf32>
    %cst = arith.constant dense<0.000000e+00> : vector<16x32xf32>
    %5 = vector.multi_reduction <add>, %4, %cst [1] : vector<16x32x32xf32> to vector<16x32xf32>
    %6 = arith.addf %3, %5 : vector<16x32xf32>
    %c0_5 = arith.constant 0 : index
    %c0_6 = arith.constant 0 : index
    %7 = vector.load %arg8[%c0_5, %c0_6] : memref<16x32xf32, #tpu.memory_space<vmem>>, vector<16x32xf32>
    tpu.vector_store %arg8[%c0_5, %c0_6], %6 {strides = array<i32>} : memref<16x32xf32, #tpu.memory_space<vmem>>, vector<16x32xf32>,
    %c0_i32_7 = arith.constant 0 : i32
    %8 = arith.cmpi eq, %arg1, %c0_i32_7 : i32
    %9 = arith.extui %8 : i1 to i32
    %c0_i32_8 = arith.constant 0 : i32
    %10 = arith.cmpi ne, %9, %c0_i32_8 : i32
    scf.if %10 {
      %c0_9 = arith.constant 0 : index
      %c0_10 = arith.constant 0 : index
      %11 = vector.load %arg8[%c0_9, %c0_10] : memref<16x32xf32, #tpu.memory_space<vmem>>, vector<16x32xf32>
      %c0_11 = arith.constant 0 : index
      %c0_12 = arith.constant 0 : index
      %12 = vector.load %arg3[%c0_11, %c0_12] : memref<32x128xf32, #tpu.memory_space<vmem>>, vector<32x128xf32>
      %cst_13 = arith.constant dense<0.000000e+00> : vector<16x128xf32>
      %13 = tpu.matmul %11, %12, %cst_13 {dimension_numbers = #tpu.dot_dimension_numbers<[1], [0], [0], [1], [0, 0, 1, 1], [], []>} : vector<16x32xf32>, vector<32x128xf32>, vector<16x128xf32> -> vector<16x128xf32>
      %cst_14 = arith.constant 3.125000e-02 : f32
      %14 = vector.broadcast %cst_14 : f32 to vector<16x128xf32>
      %15 = arith.mulf %13, %14 : vector<16x128xf32>
      %c0_15 = arith.constant 0 : index
      %c0_16 = arith.constant 0 : index
      %16 = vector.load %arg4[%c0_15, %c0_16] : memref<1x128xf32, #tpu.memory_space<vmem>>, vector<1x128xf32>
      %17 = vector.broadcast %16 : vector<1x128xf32> to vector<16x128xf32>
      %18 = arith.addf %15, %17 : vector<16x128xf32>
      %c0_17 = arith.constant 0 : index
      %c0_18 = arith.constant 0 : index
      %19 = vector.load %arg6[%c0_17, %c0_18] : memref<16x128xf32, #tpu.memory_space<vmem>>, vector<16x128xf32>
      tpu.vector_store %arg6[%c0_17, %c0_18], %18 {strides = array<i32>} : memref<16x128xf32, #tpu.memory_space<vmem>>, vector<16x128xf32>,
      %20 = tpu.iota {dimensions = array<i32: 1>} : vector<16x128xi32>
      %c4_i32 = arith.constant 4 : i32
      %21 = vector.broadcast %c4_i32 : i32 to vector<16x128xi32>
      %22 = arith.cmpi slt, %20, %21 : vector<16x128xi32>
      %cst_19 = arith.constant -1.000000e+30 : f32
      %23 = vector.broadcast %cst_19 : f32 to vector<16x128xf32>
      %24 = arith.select %22, %18, %23 : vector<16x128xi1>, vector<16x128xf32>
      %cst_20 = arith.constant dense<0xFF800000> : vector<16xf32>
      %25 = vector.multi_reduction <maximumf>, %24, %cst_20 [1] : vector<16x128xf32> to vector<16xf32>
      %26 = vector.shape_cast %25 : vector<16xf32> to vector<16x1xf32>
      %27 = vector.broadcast %26 : vector<16x1xf32> to vector<16x128xf32>
      %28 = arith.subf %24, %27 : vector<16x128xf32>
      %29 = math.exp %28 : vector<16x128xf32>
      %cst_21 = arith.constant 0.000000e+00 : f32
      %30 = vector.broadcast %cst_21 : f32 to vector<16x128xf32>
      %31 = arith.select %22, %29, %30 : vector<16x128xi1>, vector<16x128xf32>
      %cst_22 = arith.constant dense<0.000000e+00> : vector<16xf32>
      %32 = vector.multi_reduction <add>, %31, %cst_22 [1] : vector<16x128xf32> to vector<16xf32>
      %33 = vector.shape_cast %32 : vector<16xf32> to vector<16x1xf32>
      %34 = math.log %33 : vector<16x1xf32>
      %35 = arith.addf %34, %26 : vector<16x1xf32>
      %c0_23 = arith.constant 0 : index
      %c0_24 = arith.constant 0 : index
      %36 = vector.load %arg5[%c0_23, %c0_24] : memref<16x1xi32, #tpu.memory_space<vmem>>, vector<16x1xi32>
      %37 = vector.broadcast %36 : vector<16x1xi32> to vector<16x128xi32>
      %38 = arith.cmpi eq, %20, %37 : vector<16x128xi32>
      %39 = vector.broadcast %35 : vector<16x1xf32> to vector<16x128xf32>
      %40 = arith.subf %39, %24 : vector<16x128xf32>
      %cst_25 = arith.constant 0.000000e+00 : f32
      %41 = vector.broadcast %cst_25 : f32 to vector<16x128xf32>
      %42 = arith.select %38, %40, %41 : vector<16x128xi1>, vector<16x128xf32>
      %cst_26 = arith.constant dense<0.000000e+00> : vector<16xf32>
      %43 = vector.multi_reduction <add>, %42, %cst_26 [1] : vector<16x128xf32> to vector<16xf32>
      %44 = vector.shape_cast %43 : vector<16xf32> to vector<16x1xf32>
      %c0_27 = arith.constant 0 : index
      %c0_28 = arith.constant 0 : index
      %45 = vector.load %arg7[%c0_27, %c0_28] : memref<16x1xf32, #tpu.memory_space<vmem>>, vector<16x1xf32>
      tpu.vector_store %arg7[%c0_27, %c0_28], %44 {strides = array<i32>} : memref<16x1xf32, #tpu.memory_space<vmem>>, vector<16x1xf32>,
    } else {
    }
    return
  }
  func.func @transform_0(%arg0: i32, %arg1: i32) -> (i32, i32, i32) {
    %c0_i32 = arith.constant 0 : i32
    %c0_i32_0 = arith.constant 0 : i32
    return %arg0, %arg1, %c0_i32 : i32, i32, i32
  }
  func.func @transform_1(%arg0: i32, %arg1: i32) -> (i32, i32) {
    %c0_i32 = arith.constant 0 : i32
    %c0_i32_0 = arith.constant 0 : i32
    %c0_i32_1 = arith.constant 0 : i32
    return %c0_i32, %c0_i32_0 : i32, i32
  }
  func.func @transform_2(%arg0: i32, %arg1: i32) -> (i32, i32) {
    %c0_i32 = arith.constant 0 : i32
    %c0_i32_0 = arith.constant 0 : i32
    %c0_i32_1 = arith.constant 0 : i32
    return %c0_i32, %c0_i32_0 : i32, i32
  }
  func.func @transform_3(%arg0: i32, %arg1: i32) -> (i32, i32) {
    %c0_i32 = arith.constant 0 : i32
    %c0_i32_0 = arith.constant 0 : i32
    return %arg0, %c0_i32 : i32, i32
  }
  func.func @transform_4(%arg0: i32, %arg1: i32) -> (i32, i32) {
    %c0_i32 = arith.constant 0 : i32
    %c0_i32_0 = arith.constant 0 : i32
    return %arg0, %c0_i32 : i32, i32
  }
  func.func @transform_5(%arg0: i32, %arg1: i32) -> (i32, i32) {
    %c0_i32 = arith.constant 0 : i32
    %c0_i32_0 = arith.constant 0 : i32
    return %arg0, %c0_i32 : i32, i32
  }
}

</mosaic_0001>

<llo_original>
// kernel: tpu_custom_call.1
$region0: #{tpu_custom_call.1}
  #allocation0 [shape = 'u32[]', space=smem, size = 0x4, offset = 0x4, fixed_abs, tag = 'smem constant byte address 0x4 - core index']
  #allocation1 [shape = 'u32[72,128]{1,0:T(1,128)}', space=vmem, size = 0x9000, scoped, tag = 'internal scratch']
  #allocation2 [shape = 'f32[16,32]{1,0:T(8,128)}', space=vmem, size = 0x2000, scoped, tag = 'scratch operand']
  %s0 = inlined_call_operand.hbm [shape: f32[16,32,32], index: 0, kind: input, shape index: {}]
  %s1 = inlined_call_operand.hbm [shape: f32[32,128], index: 1, kind: input, shape index: {}]
  %s2 = inlined_call_operand.vmem [shape: f32[1,128], index: 2, kind: input, shape index: {}]
  %s3 = inlined_call_operand.vmem [shape: s32[16,1], index: 3, kind: input, shape index: {}]
  %s4 = inlined_call_operand.hbm [shape: f32[16,128], index: 4, kind: output, shape index: {0}]
  %s5 = inlined_call_operand.vmem [shape: f32[16,1], index: 5, kind: output, shape index: {1}]
  %6 = xla_tuple %s4, %s5
  %s7 = sld [smem:[#allocation0]]
  $region50: #{tpu_custom_call.1} parent=0
    _
  %s9 = ssub.s32 1, %s7
  %s10 = scalar_select 0, %s9, %s7
  $region1: #{tpu_custom_call.1} parent=0
    #allocation3 [shape = 'u8[262144]{0}', space=vmem, size = 0x40000, scoped, tag = 'input window, operand 0, single buffered']
    #allocation4 [shape = 's32[1]{0}', space=sflag, size = 0x4, scoped, tag = 'scoped memory for tpu_custom_call.1']
    #allocation5 [shape = 's32[1]{0}', space=sflag, size = 0x4, scoped, tag = 'scoped memory for tpu_custom_call.1']
    #allocation6 [shape = 'u8[16384]{0}', space=vmem, size = 0x4000, scoped, tag = 'input window, operand 1, single buffered']
    #allocation7 [shape = 's32[1]{0}', space=sflag, size = 0x4, scoped, tag = 'scoped memory for tpu_custom_call.1']
    #allocation8 [shape = 'u8[8192]{0}', space=vmem, size = 0x2000, scoped, tag = 'output window, operand 0, single buffered']
    %11 = vsyncpa [#allocation4], 0
    %12 = vsyncpa [#allocation7], 0
    %13 = vsyncpa [#allocation5], 0
    // Predicated region
    $region2: #{tpu_custom_call.1} parent=1 // pred_check
      _
    $region3: #{tpu_custom_call.1} parent=1 // pred_check_branch
      %15 = sbr.rel (0) target = $region5
    $region4: #{tpu_custom_call.1} parent=1 // pred_region
      %17 = vsyncadd [#allocation4], 0
      %s18 = sshll.u32 %s0, 4
      %s19 = int_to_ptr.hbm [resolvable:$true] %s18
      %s20 = sshll.u32 [#allocation3], 4
      %s21 = int_to_ptr.vmem [resolvable:$true] %s20
      %26 = dma.hbm_to_vmem [thread:$0]  %s19, 8192, %s21, [#allocation4], 128, 128, 8
    $region5: #{tpu_custom_call.1} parent=1 // pred_fallthru
      _
    // Predicated region
    $region6: #{tpu_custom_call.1} parent=1 // pred_check
      _
    $region7: #{tpu_custom_call.1} parent=1 // pred_check_branch
      %28 = sbr.rel (0) target = $region9
    $region8: #{tpu_custom_call.1} parent=1 // pred_region
      %30 = vsyncadd [#allocation7], 0
      %s31 = sshll.u32 %s1, 4
      %s32 = int_to_ptr.hbm [resolvable:$true] %s31
      %s33 = sshll.u32 [#allocation6], 4
      %s34 = int_to_ptr.vmem [resolvable:$true] %s33
      %39 = dma.hbm_to_vmem [thread:$0]  %s32, 512, %s34, [#allocation7], 128, 128, 8
    $region9: #{tpu_custom_call.1} parent=1 // pred_fallthru
      _
    // Predicated region
    $region10: #{tpu_custom_call.1} parent=1 // pred_check
      _
    $region11: #{tpu_custom_call.1} parent=1 // pred_check_branch
      %41 = sbr.rel (0) target = $region13
    $region12: #{tpu_custom_call.1} parent=1 // pred_region
      _
    $region13: #{tpu_custom_call.1} parent=1 // pred_fallthru
      _
    // Predicated region
    $region14: #{tpu_custom_call.1} parent=1 // pred_check
      _
    $region15: #{tpu_custom_call.1} parent=1 // pred_check_branch
      %43 = sbr.rel (0) target = $region17
    $region16: #{tpu_custom_call.1} parent=1 // pred_region
      _
    $region17: #{tpu_custom_call.1} parent=1 // pred_fallthru
      _
    // Predicated region
    $region18: #{tpu_custom_call.1} parent=1 // pred_check
      _
    $region19: #{tpu_custom_call.1} parent=1 // pred_check_branch
      %45 = sbr.rel (0) target = $region21
    $region20: #{tpu_custom_call.1} parent=1 // pred_region
      %47 = dma.done [#allocation4], 8192
    $region21: #{tpu_custom_call.1} parent=1 // pred_fallthru
      _
    // Predicated region
    $region22: #{tpu_custom_call.1} parent=1 // pred_check
      _
    $region23: #{tpu_custom_call.1} parent=1 // pred_check_branch
      %49 = sbr.rel (0) target = $region25
    $region24: #{tpu_custom_call.1} parent=1 // pred_region
      %51 = dma.done [#allocation7], 512
    $region25: #{tpu_custom_call.1} parent=1 // pred_fallthru
      _
    %p52 = scmp.eq.s32.totalorder 0, 0
    // Predicated region
    $region26: #{tpu_custom_call.1} parent=1 // pred_check
      %p53 = pneg %p52
    $region27: #{tpu_custom_call.1} parent=1 // pred_check_branch
      %55 = sbr.rel (%p53) target = $region29
    $region28: #{tpu_custom_call.1} parent=1 // pred_region
      %vm56 = vcmask 261120
      %57 = vst.msk [vmem:[#allocation2] sm:$0xff] %vm56, 0.0
      %58 = vst.msk [vmem:[#allocation2 + $0x8] sm:$0xff] %vm56, 0.0
    $region29: #{tpu_custom_call.1} parent=1 // pred_fallthru
      _
    %v59 = vld [vmem:[#allocation2] sm:$0xff]
    %v60 = vld [vmem:[#allocation2 + $0x8] sm:$0xff]
    %v61 = vld [vmem:[#allocation3] sm:$0xff]
    %v62 = vld [vmem:[#allocation3 + $0x8] sm:$0xff]
    %v63 = vld [vmem:[#allocation3 + $0x10] sm:$0xff]
    %v64 = vld [vmem:[#allocation3 + $0x18] sm:$0xff]
    %v65 = vld [vmem:[#allocation3 + $0x20] sm:$0xff]
    %v66 = vld [vmem:[#allocation3 + $0x28] sm:$0xff]
    %v67 = vld [vmem:[#allocation3 + $0x30] sm:$0xff]
    %v68 = vld [vmem:[#allocation3 + $0x38] sm:$0xff]
    %v69 = vld [vmem:[#allocation3 + $0x40] sm:$0xff]
    %v70 = vld [vmem:[#allocation3 + $0x48] sm:$0xff]
    %v71 = vld [vmem:[#allocation3 + $0x50] sm:$0xff]
    %v72 = vld [vmem:[#allocation3 + $0x58] sm:$0xff]
    %v73 = vld [vmem:[#allocation3 + $0x60] sm:$0xff]
    %v74 = vld [vmem:[#allocation3 + $0x68] sm:$0xff]
    %v75 = vld [vmem:[#allocation3 + $0x70] sm:$0xff]
    %v76 = vld [vmem:[#allocation3 + $0x78] sm:$0xff]
    %v77 = vld [vmem:[#allocation3 + $0x80] sm:$0xff]
    %v78 = vld [vmem:[#allocation3 + $0x88] sm:$0xff]
    %v79 = vld [vmem:[#allocation3 + $0x90] sm:$0xff]
    %v80 = vld [vmem:[#allocation3 + $0x98] sm:$0xff]
    %v81 = vld [vmem:[#allocation3 + $0xa0] sm:$0xff]
    %v82 = vld [vmem:[#allocation3 + $0xa8] sm:$0xff]
    %v83 = vld [vmem:[#allocation3 + $0xb0] sm:$0xff]
    %v84 = vld [vmem:[#allocation3 + $0xb8] sm:$0xff]
    %v85 = vld [vmem:[#allocation3 + $0xc0] sm:$0xff]
    %v86 = vld [vmem:[#allocation3 + $0xc8] sm:$0xff]
    %v87 = vld [vmem:[#allocation3 + $0xd0] sm:$0xff]
    %v88 = vld [vmem:[#allocation3 + $0xd8] sm:$0xff]
    %v89 = vld [vmem:[#allocation3 + $0xe0] sm:$0xff]
    %v90 = vld [vmem:[#allocation3 + $0xe8] sm:$0xff]
    %v91 = vld [vmem:[#allocation3 + $0xf0] sm:$0xff]
    %v92 = vld [vmem:[#allocation3 + $0xf8] sm:$0xff]
    %v93 = vld [vmem:[#allocation3 + $0x100] sm:$0xff]
    %v94 = vld [vmem:[#allocation3 + $0x108] sm:$0xff]
    %v95 = vld [vmem:[#allocation3 + $0x110] sm:$0xff]
    %v96 = vld [vmem:[#allocation3 + $0x118] sm:$0xff]
    %v97 = vld [vmem:[#allocation3 + $0x120] sm:$0xff]
    %v98 = vld [vmem:[#allocation3 + $0x128] sm:$0xff]
    %v99 = vld [vmem:[#allocation3 + $0x130] sm:$0xff]
    %v100 = vld [vmem:[#allocation3 + $0x138] sm:$0xff]
    %v101 = vld [vmem:[#allocation3 + $0x140] sm:$0xff]
    %v102 = vld [vmem:[#allocation3 + $0x148] sm:$0xff]
    %v103 = vld [vmem:[#allocation3 + $0x150] sm:$0xff]
    %v104 = vld [vmem:[#allocation3 + $0x158] sm:$0xff]
    %v105 = vld [vmem:[#allocation3 + $0x160] sm:$0xff]
    %v106 = vld [vmem:[#allocation3 + $0x168] sm:$0xff]
    %v107 = vld [vmem:[#allocation3 + $0x170] sm:$0xff]
    %v108 = vld [vmem:[#allocation3 + $0x178] sm:$0xff]
    %v109 = vld [vmem:[#allocation3 + $0x180] sm:$0xff]
    %v110 = vld [vmem:[#allocation3 + $0x188] sm:$0xff]
    %v111 = vld [vmem:[#allocation3 + $0x190] sm:$0xff]
    %v112 = vld [vmem:[#allocation3 + $0x198] sm:$0xff]
    %v113 = vld [vmem:[#allocation3 + $0x1a0] sm:$0xff]
    %v114 = vld [vmem:[#allocation3 + $0x1a8] sm:$0xff]
    %v115 = vld [vmem:[#allocation3 + $0x1b0] sm:$0xff]
    %v116 = vld [vmem:[#allocation3 + $0x1b8] sm:$0xff]
    %v117 = vld [vmem:[#allocation3 + $0x1c0] sm:$0xff]
    %v118 = vld [vmem:[#allocation3 + $0x1c8] sm:$0xff]
    %v119 = vld [vmem:[#allocation3 + $0x1d0] sm:$0xff]
    %v120 = vld [vmem:[#allocation3 + $0x1d8] sm:$0xff]
    %v121 = vld [vmem:[#allocation3 + $0x1e0] sm:$0xff]
    %v122 = vld [vmem:[#allocation3 + $0x1e8] sm:$0xff]
    %v123 = vld [vmem:[#allocation3 + $0x1f0] sm:$0xff]
    %v124 = vld [vmem:[#allocation3 + $0x1f8] sm:$0xff]
    %vm125 = vcmask 261120
    %v126 = vsel %vm125, %v61, 0.0
    %v127 = vsel %vm125, %v62, 0.0
    %v128 = vadd.f32 %v126, %v127
    %v129 = vsel %vm125, %v63, 0.0
    %v130 = vadd.f32 %v128, %v129
    %v131 = vsel %vm125, %v64, 0.0
    %v132 = vadd.f32 %v130, %v131
    %v133 = vrot.slane %v132, 4
    %v134 = vadd.f32 %v132, %v133
    %v135 = vrot.slane %v134, 2
    %v136 = vadd.f32 %v134, %v135
    %v137 = vrot.slane %v136, 1
    %v138 = vadd.f32 %v136, %v137
    %v139 = vsel %vm125, %v65, 0.0
    %v140 = vsel %vm125, %v66, 0.0
    %v141 = vadd.f32 %v139, %v140
    %v142 = vsel %vm125, %v67, 0.0
    %v143 = vadd.f32 %v141, %v142
    %v144 = vsel %vm125, %v68, 0.0
    %v145 = vadd.f32 %v143, %v144
    %v146 = vrot.slane %v145, 4
    %v147 = vadd.f32 %v145, %v146
    %v148 = vrot.slane %v147, 2
    %v149 = vadd.f32 %v147, %v148
    %v150 = vrot.slane %v149, 1
    %v151 = vadd.f32 %v149, %v150
    %v152 = vsel %vm125, %v69, 0.0
    %v153 = vsel %vm125, %v70, 0.0
    %v154 = vadd.f32 %v152, %v153
    %v155 = vsel %vm125, %v71, 0.0
    %v156 = vadd.f32 %v154, %v155
    %v157 = vsel %vm125, %v72, 0.0
    %v158 = vadd.f32 %v156, %v157
    %v159 = vrot.slane %v158, 4
    %v160 = vadd.f32 %v158, %v159
    %v161 = vrot.slane %v160, 2
    %v162 = vadd.f32 %v160, %v161
    %v163 = vrot.slane %v162, 1
    %v164 = vadd.f32 %v162, %v163
    %v165 = vsel %vm125, %v73, 0.0
    %v166 = vsel %vm125, %v74, 0.0
    %v167 = vadd.f32 %v165, %v166
    %v168 = vsel %vm125, %v75, 0.0
    %v169 = vadd.f32 %v167, %v168
    %v170 = vsel %vm125, %v76, 0.0
    %v171 = vadd.f32 %v169, %v170
    %v172 = vrot.slane %v171, 4
    %v173 = vadd.f32 %v171, %v172
    %v174 = vrot.slane %v173, 2
    %v175 = vadd.f32 %v173, %v174
    %v176 = vrot.slane %v175, 1
    %v177 = vadd.f32 %v175, %v176
    %v178 = vsel %vm125, %v77, 0.0
    %v179 = vsel %vm125, %v78, 0.0
    %v180 = vadd.f32 %v178, %v179
    %v181 = vsel %vm125, %v79, 0.0
    %v182 = vadd.f32 %v180, %v181
    %v183 = vsel %vm125, %v80, 0.0
    %v184 = vadd.f32 %v182, %v183
    %v185 = vrot.slane %v184, 4
    %v186 = vadd.f32 %v184, %v185
    %v187 = vrot.slane %v186, 2
    %v188 = vadd.f32 %v186, %v187
    %v189 = vrot.slane %v188, 1
    %v190 = vadd.f32 %v188, %v189
    %v191 = vsel %vm125, %v81, 0.0
    %v192 = vsel %vm125, %v82, 0.0
    %v193 = vadd.f32 %v191, %v192
    %v194 = vsel %vm125, %v83, 0.0
    %v195 = vadd.f32 %v193, %v194
    %v196 = vsel %vm125, %v84, 0.0
    %v197 = vadd.f32 %v195, %v196
    %v198 = vrot.slane %v197, 4
    %v199 = vadd.f32 %v197, %v198
    %v200 = vrot.slane %v199, 2
    %v201 = vadd.f32 %v199, %v200
    %v202 = vrot.slane %v201, 1
    %v203 = vadd.f32 %v201, %v202
    %v204 = vsel %vm125, %v85, 0.0
    %v205 = vsel %vm125, %v86, 0.0
    %v206 = vadd.f32 %v204, %v205
    %v207 = vsel %vm125, %v87, 0.0
    %v208 = vadd.f32 %v206, %v207
    %v209 = vsel %vm125, %v88, 0.0
    %v210 = vadd.f32 %v208, %v209
    %v211 = vrot.slane %v210, 4
    %v212 = vadd.f32 %v210, %v211
    %v213 = vrot.slane %v212, 2
    %v214 = vadd.f32 %v212, %v213
    %v215 = vrot.slane %v214, 1
    %v216 = vadd.f32 %v214, %v215
    %v217 = vsel %vm125, %v89, 0.0
    %v218 = vsel %vm125, %v90, 0.0
    %v219 = vadd.f32 %v217, %v218
    %v220 = vsel %vm125, %v91, 0.0
    %v221 = vadd.f32 %v219, %v220
    %v222 = vsel %vm125, %v92, 0.0
    %v223 = vadd.f32 %v221, %v222
    %v224 = vrot.slane %v223, 4
    %v225 = vadd.f32 %v223, %v224
    %v226 = vrot.slane %v225, 2
    %v227 = vadd.f32 %v225, %v226
    %v228 = vrot.slane %v227, 1
    %v229 = vadd.f32 %v227, %v228
    %v230 = vsel %vm125, %v93, 0.0
    %v231 = vsel %vm125, %v94, 0.0
    %v232 = vadd.f32 %v230, %v231
    %v233 = vsel %vm125, %v95, 0.0
    %v234 = vadd.f32 %v232, %v233
    %v235 = vsel %vm125, %v96, 0.0
    %v236 = vadd.f32 %v234, %v235
    %v237 = vrot.slane %v236, 4
    %v238 = vadd.f32 %v236, %v237
    %v239 = vrot.slane %v238, 2
    %v240 = vadd.f32 %v238, %v239
    %v241 = vrot.slane %v240, 1
    %v242 = vadd.f32 %v240, %v241
    %v243 = vsel %vm125, %v97, 0.0
    %v244 = vsel %vm125, %v98, 0.0
    %v245 = vadd.f32 %v243, %v244
    %v246 = vsel %vm125, %v99, 0.0
    %v247 = vadd.f32 %v245, %v246
    %v248 = vsel %vm125, %v100, 0.0
    %v249 = vadd.f32 %v247, %v248
    %v250 = vrot.slane %v249, 4
    %v251 = vadd.f32 %v249, %v250
    %v252 = vrot.slane %v251, 2
    %v253 = vadd.f32 %v251, %v252
    %v254 = vrot.slane %v253, 1
    %v255 = vadd.f32 %v253, %v254
    %v256 = vsel %vm125, %v101, 0.0
    %v257 = vsel %vm125, %v102, 0.0
    %v258 = vadd.f32 %v256, %v257
    %v259 = vsel %vm125, %v103, 0.0
    %v260 = vadd.f32 %v258, %v259
    %v261 = vsel %vm125, %v104, 0.0
    %v262 = vadd.f32 %v260, %v261
    %v263 = vrot.slane %v262, 4
    %v264 = vadd.f32 %v262, %v263
    %v265 = vrot.slane %v264, 2
    %v266 = vadd.f32 %v264, %v265
    %v267 = vrot.slane %v266, 1
    %v268 = vadd.f32 %v266, %v267
    %v269 = vsel %vm125, %v105, 0.0
    %v270 = vsel %vm125, %v106, 0.0
    %v271 = vadd.f32 %v269, %v270
    %v272 = vsel %vm125, %v107, 0.0
    %v273 = vadd.f32 %v271, %v272
    %v274 = vsel %vm125, %v108, 0.0
    %v275 = vadd.f32 %v273, %v274
    %v276 = vrot.slane %v275, 4
    %v277 = vadd.f32 %v275, %v276
    %v278 = vrot.slane %v277, 2
    %v279 = vadd.f32 %v277, %v278
    %v280 = vrot.slane %v279, 1
    %v281 = vadd.f32 %v279, %v280
    %v282 = vsel %vm125, %v109, 0.0
    %v283 = vsel %vm125, %v110, 0.0
    %v284 = vadd.f32 %v282, %v283
    %v285 = vsel %vm125, %v111, 0.0
    %v286 = vadd.f32 %v284, %v285
    %v287 = vsel %vm125, %v112, 0.0
    %v288 = vadd.f32 %v286, %v287
    %v289 = vrot.slane %v288, 4
    %v290 = vadd.f32 %v288, %v289
    %v291 = vrot.slane %v290, 2
    %v292 = vadd.f32 %v290, %v291
    %v293 = vrot.slane %v292, 1
    %v294 = vadd.f32 %v292, %v293
    %v295 = vsel %vm125, %v113, 0.0
    %v296 = vsel %vm125, %v114, 0.0
    %v297 = vadd.f32 %v295, %v296
    %v298 = vsel %vm125, %v115, 0.0
    %v299 = vadd.f32 %v297, %v298
    %v300 = vsel %vm125, %v116, 0.0
    %v301 = vadd.f32 %v299, %v300
    %v302 = vrot.slane %v301, 4
    %v303 = vadd.f32 %v301, %v302
    %v304 = vrot.slane %v303, 2
    %v305 = vadd.f32 %v303, %v304
    %v306 = vrot.slane %v305, 1
    %v307 = vadd.f32 %v305, %v306
    %v308 = vsel %vm125, %v117, 0.0
    %v309 = vsel %vm125, %v118, 0.0
    %v310 = vadd.f32 %v308, %v309
    %v311 = vsel %vm125, %v119, 0.0
    %v312 = vadd.f32 %v310, %v311
    %v313 = vsel %vm125, %v120, 0.0
    %v314 = vadd.f32 %v312, %v313
    %v315 = vrot.slane %v314, 4
    %v316 = vadd.f32 %v314, %v315
    %v317 = vrot.slane %v316, 2
    %v318 = vadd.f32 %v316, %v317
    %v319 = vrot.slane %v318, 1
    %v320 = vadd.f32 %v318, %v319
    %v321 = vsel %vm125, %v121, 0.0
    %v322 = vsel %vm125, %v122, 0.0
    %v323 = vadd.f32 %v321, %v322
    %v324 = vsel %vm125, %v123, 0.0
    %v325 = vadd.f32 %v323, %v324
    %v326 = vsel %vm125, %v124, 0.0
    %v327 = vadd.f32 %v325, %v326
    %v328 = vrot.slane %v327, 4
    %v329 = vadd.f32 %v327, %v328
    %v330 = vrot.slane %v329, 2
    %v331 = vadd.f32 %v329, %v330
    %v332 = vrot.slane %v331, 1
    %v333 = vadd.f32 %v331, %v332
    %vm350 = vcmask 1041409
    %v351 = vsel %vm350, %v151, %v138
    %vm352 = vcmask 1042434
    %v353 = vsel %vm352, %v164, %v351
    %vm354 = vcmask 1043459
    %v355 = vsel %vm354, %v177, %v353
    %vm356 = vcmask 1044484
    %v357 = vsel %vm356, %v190, %v355
    %vm358 = vcmask 1045509
    %v359 = vsel %vm358, %v203, %v357
    %vm360 = vcmask 1046534
    %v361 = vsel %vm360, %v216, %v359
    %vm362 = vcmask 1047559
    %v363 = vsel %vm362, %v229, %v361
    %v364 = vsel %vm350, %v255, %v242
    %v365 = vsel %vm352, %v268, %v364
    %v366 = vsel %vm354, %v281, %v365
    %v367 = vsel %vm356, %v294, %v366
    %v368 = vsel %vm358, %v307, %v367
    %v369 = vsel %vm360, %v320, %v368
    %v370 = vsel %vm362, %v333, %v369
    %v373 = vadd.f32 %v59, %v363
    %v374 = vadd.f32 %v60, %v370
    %375 = vst.msk [vmem:[#allocation2] sm:$0xff] %vm125, %v373
    %376 = vst.msk [vmem:[#allocation2 + $0x8] sm:$0xff] %vm125, %v374
    // Predicated region
    $region30: #{tpu_custom_call.1} parent=1 // pred_check
      %p377 = pneg %p52
    $region31: #{tpu_custom_call.1} parent=1 // pred_check_branch
      %379 = sbr.rel (%p377) target = $region33
    $region32: #{tpu_custom_call.1} parent=1 // pred_region
      %v380 = vld [vmem:[#allocation2] sm:$0xff]
      %v381 = vld [vmem:[#allocation2 + $0x8] sm:$0xff]
      %v382 = vld [vmem:[#allocation6] sm:$0xff]
      %v383 = vld [vmem:[#allocation6 + $0x8] sm:$0xff]
      %v384 = vld [vmem:[#allocation6 + $0x10] sm:$0xff]
      %v385 = vld [vmem:[#allocation6 + $0x18] sm:$0xff]
      %v387 = vsel %vm125, %v380, 0
      %v390 = vsel %vm125, %v381, 0
      %392 = vmatpush.msra.mxu0 0.0
      %393 = vmatpush.msra.mxu0 0.0
      %394 = vmatpush.msra.mxu0 0.0
      %395 = vmatpush.msra.mxu0 0.0
      %396 = vmatpush.msra.mxu0 0.0
      %397 = vmatpush.msra.mxu0 0.0
      %398 = vmatpush.msra.mxu0 0.0
      %399 = vmatpush.msra.mxu0 0.0
      %400 = vmatpush.msra.mxu0 0.0
      %401 = vmatpush.msra.mxu0 0.0
      %402 = vmatpush.msra.mxu0 0.0
      %403 = vmatpush.msra.mxu0 0.0
      %404 = vmatpush.msra.mxu0 %v385
      %405 = vmatpush.msra.mxu0 %v384
      %406 = vmatpush.msra.mxu0 %v383
      %407 = vmatpush.msra.mxu0 %v382
      %408 = vmatmul.f32.gmra.mxu0 %v387
      %v409 = vpop.f32.mrf.mxu0
      %v410 = vadd.f32 0.0, %v409
      %411 = vmatmul.f32.gmra.mxu0 %v390
      %v412 = vpop.f32.mrf.mxu0
      %v413 = vadd.f32 0.0, %v412
      %414 = vdwg.mxu0
      %v415 = vmul.f32 %v410, 0.03125
      %v416 = vmul.f32 %v413, 0.03125
      %v417 = vld [vmem:[%s2] sm:$0x1]
      %v419 = vperm.slane %v417, 0
      %v421 = vadd.f32 %v415, %v419
      %v422 = vadd.f32 %v416, %v419
      %423 = vst [vmem:[#allocation8] sm:$0xff] %v421
      %424 = vst [vmem:[#allocation8 + $0x8] sm:$0xff] %v422
      %v425 = vlaneseq
      %v426 = vand.u32 %v425, 127
      %vm427 = vcmp.lt.s32.totalorder %v426, 4
      %v428 = vsel %vm427, %v421, -1e+30
      %v429 = vsel %vm427, %v422, -1e+30
      %430 = vmax.xlane.f32.xlu0 %v428
      %v431 = vpop.xlane.xlu0 %430
      %432 = vmax.xlane.f32.xlu0 %v429
      %v433 = vpop.xlane.xlu0 %432
      %v434 = vsub.f32 %v428, %v431
      %v435 = vsub.f32 %v429, %v433
      %v436 = vmul.f32 %v434, 1.442695
      %v437 = vpow.pop %v436
      %v438 = vmul.f32 %v435, 1.442695
      %v439 = vpow.pop %v438
      %v440 = vsel %vm427, %v437, 0.0
      %v441 = vsel %vm427, %v439, 0.0
      %442 = vadd.xlane.f32.xlu0 %v440
      %v443 = vpop.xlane.xlu0 %442
      %444 = vadd.xlane.f32.xlu0 %v441
      %v445 = vpop.xlane.xlu0 %444
      %v446 = vlog2.pop %v443
      %v447 = vmul.f32 %v446, 0.6931472
      %v448 = vlog2.pop %v445
      %v449 = vmul.f32 %v448, 0.6931472
      %v450 = vadd.f32 %v447, %v431
      %v451 = vadd.f32 %v449, %v433
      %v452 = vld [vmem:[%s3] sm:$0xff]
      %v453 = vld [vmem:[%s3 + $0x8] sm:$0xff]
      %454 = vset.pattern.permute.xlu0 0
      %455 = vperm.xlu0 %454, %v452
      %v456 = vpop.permute.xlu0 %455
      %457 = vset.pattern.permute.xlu0 0
      %458 = vperm.xlu0 %457, %v453
      %v459 = vpop.permute.xlu0 %458
      %vm460 = vcmp.eq.s32.totalorder %v426, %v456
      %vm461 = vcmp.eq.s32.totalorder %v426, %v459
      %v462 = vsub.f32 %v450, %v428
      %v463 = vsub.f32 %v451, %v429
      %v464 = vsel %vm460, %v462, 0.0
      %v465 = vsel %vm461, %v463, 0.0
      %466 = vadd.xlane.f32.xlu0 %v464
      %v467 = vpop.xlane.xlu0 %466
      %468 = vadd.xlane.f32.xlu0 %v465
      %v469 = vpop.xlane.xlu0 %468
      %vm470 = vcmask 7168
      %471 = vst.msk [vmem:[%s5] sm:$0xff] %vm470, %v467
      %472 = vst.msk [vmem:[%s5 + $0x8] sm:$0xff] %vm470, %v469
    $region33: #{tpu_custom_call.1} parent=1 // pred_fallthru
      _
    // Predicated region
    $region34: #{tpu_custom_call.1} parent=1 // pred_check
      _
    $region35: #{tpu_custom_call.1} parent=1 // pred_check_branch
      %474 = sbr.rel (0) target = $region37
    $region36: #{tpu_custom_call.1} parent=1 // pred_region
      %476 = vsyncadd [#allocation5], 0
      %s477 = sshll.u32 [#allocation8], 4
      %s478 = int_to_ptr.vmem [resolvable:$true] %s477
      %s479 = sshll.u32 %s4, 4
      %s480 = int_to_ptr.hbm [resolvable:$true] %s479
      %485 = dma.vmem_to_hbm [thread:$0]  %s478, 256, %s480, [#allocation5], 128, 128, 8
    $region37: #{tpu_custom_call.1} parent=1 // pred_fallthru
      _
    // Predicated region
    $region38: #{tpu_custom_call.1} parent=1 // pred_check
      _
    $region39: #{tpu_custom_call.1} parent=1 // pred_check_branch
      %487 = sbr.rel (0) target = $region41
    $region40: #{tpu_custom_call.1} parent=1 // pred_region
      _
    $region41: #{tpu_custom_call.1} parent=1 // pred_fallthru
      _
    // Predicated region
    $region42: #{tpu_custom_call.1} parent=1 // pred_check
      _
    $region43: #{tpu_custom_call.1} parent=1 // pred_check_branch
      %489 = sbr.rel (0) target = $region45
    $region44: #{tpu_custom_call.1} parent=1 // pred_region
      %491 = dma.done [#allocation5], 256
    $region45: #{tpu_custom_call.1} parent=1 // pred_fallthru
      _
    // Predicated region
    $region46: #{tpu_custom_call.1} parent=1 // pred_check
      _
    $region47: #{tpu_custom_call.1} parent=1 // pred_check_branch
      %493 = sbr.rel (0) target = $region49
    $region48: #{tpu_custom_call.1} parent=1 // pred_region
      _
    $region49: #{tpu_custom_call.1} parent=1 // pred_fallthru
      _
    %494 = vsyncpa [#allocation4], 1
    %495 = vsyncpa [#allocation7], 1
    %496 = vsyncpa [#allocation5], 1

</llo_original>
